<compile_context>
chip_gen: v5e
topology: v5e:2x2
jax: 0.10.0
libtpu: 0.0.40
codegen_flags: <defaults>
</compile_context>

<pallas_src>
import functools

import jax
import jax.numpy as jnp
from jax import lax
from jax.experimental import pallas as pl
from jax.experimental.pallas import tpu as pltpu


SUB = 128           # rows per in-kernel sub-chunk (sublane-tile multiple)
MAX_TILE_B = 1024   # cap on rows per grid step


def _round_up(x, m):
    return ((x + m - 1) // m) * m


def _pick_tile_b(batch):
    """Rows per grid step: big enough to amortize per-step pipeline overhead (~0.35us),
    while guaranteeing >=2 grid blocks whenever batch > 128 (v7x megacore)."""
    b128 = max(_round_up(batch, SUB), SUB)
    if b128 <= SUB:
        return SUB
    if b128 <= 2 * MAX_TILE_B:
        return _round_up(b128 // 2, SUB)
    return MAX_TILE_B


def _dqn_kernel(x_ref, w1_ref, b1_ref, w2_ref, b2_ref, w3_ref, b3_ref, out_ref, *, n_sub):
    # Hoist weight / bias loads (and bias broadcasts) out of the sub-chunk loop.
    w1 = w1_ref[...]
    w2 = w2_ref[...]
    w3 = w3_ref[...]
    hid = w1.shape[1]
    b1 = jnp.broadcast_to(b1_ref[...], (SUB, hid))
    b2 = jnp.broadcast_to(b2_ref[...], (SUB, hid))
    b3 = jnp.broadcast_to(b3_ref[...], (SUB, w3.shape[1]))
    out_dim = out_ref.shape[1]

    def body(c, carry):
        r = pl.multiple_of(c * SUB, SUB)
        x = x_ref[pl.ds(r, SUB), :].astype(jnp.bfloat16)              # f32->bf16 on the VPU
        h1 = jnp.dot(x, w1, preferred_element_type=jnp.float32)       # MXU, f32 acc
        h1 = jnp.maximum(h1 + b1, 0.0)
        h2 = jnp.dot(h1.astype(jnp.bfloat16), w2, preferred_element_type=jnp.float32)
        h2 = jnp.maximum(h2 + b2, 0.0)
        y = jnp.dot(h2.astype(jnp.bfloat16), w3, preferred_element_type=jnp.float32) + b3
        out_ref[pl.ds(r, SUB), :] = y[:, :out_dim]                    # store only real columns
        return carry

    lax.fori_loop(0, n_sub, body, 0, unroll=True)


def dqn_forward(x, kernel_params, output_dim):
    """Fused DQN forward. x: (B, input_dim) float32. Returns (B, output_dim) float32."""
    w1, b1, w2, b2, w3, b3 = kernel_params  # bf16 weights (in,out); f32 biases (1,out); w3/b3 column-padded
    B, d_in = x.shape

    tile_b = _pick_tile_b(B)
    n_blocks = pl.cdiv(B, tile_b)
    b_pad = n_blocks * tile_b
    if b_pad != B:
        x = jnp.pad(x, ((0, b_pad - B), (0, 0)))   # zero rows flow harmlessly through the MLP

    const2d = lambda a: pl.BlockSpec(a.shape, lambda i: (0, 0))   # VMEM-resident across grid steps

    kernel = functools.partial(_dqn_kernel, n_sub=tile_b // SUB)

    out = pl.pallas_call(
        kernel,
        out_shape=jax.ShapeDtypeStruct((b_pad, output_dim), jnp.float32),
        grid=(n_blocks,),
        in_specs=[
            pl.BlockSpec((tile_b, d_in), lambda i: (i, 0)),   # x: tiled over batch, f32
            const2d(w1), const2d(b1),
            const2d(w2), const2d(b2),
            const2d(w3), const2d(b3),
        ],
        out_specs=pl.BlockSpec((tile_b, output_dim), lambda i: (i, 0)),   # real columns only
        compiler_params=pltpu.CompilerParams(dimension_semantics=("parallel",)),
    )(x, w1, b1, w2, b2, w3, b3)

    return out[:B] if b_pad != B else out


def init_dqn_params(key, input_dim, output_dim, hidden=128):
    """PyTorch nn.Linear-style init (U[-1/sqrt(fan_in), 1/sqrt(fan_in)]), weights in (in,out).

    Returns:
      params_f32   : unpadded f32 params for the plain-JAX reference.
      kernel_params: bf16 weights / f32 biases, with w3/b3 columns zero-padded to a
                     multiple of 128 (MXU-friendly last layer; extra cols never stored).
    """
    def linear(k, fan_in, fan_out):
        kw, kb = jax.random.split(k)
        bound = 1.0 / jnp.sqrt(jnp.float32(fan_in))
        w = jax.random.uniform(kw, (fan_in, fan_out), jnp.float32, -bound, bound)
        b = jax.random.uniform(kb, (1, fan_out), jnp.float32, -bound, bound)
        return w, b

    k1, k2, k3 = jax.random.split(key, 3)
    w1, b1 = linear(k1, input_dim, hidden)
    w2, b2 = linear(k2, hidden, hidden)
    w3, b3 = linear(k3, hidden, output_dim)
    params_f32 = (w1, b1, w2, b2, w3, b3)

    out_pad = _round_up(output_dim, 128)
    pad_cols = out_pad - output_dim
    w3p = jnp.pad(w3, ((0, 0), (0, pad_cols)))
    b3p = jnp.pad(b3, ((0, 0), (0, pad_cols)))

    kernel_params = (
        w1.astype(jnp.bfloat16), b1,                 # biases stay f32 (added to f32 acc)
        w2.astype(jnp.bfloat16), b2,
        w3p.astype(jnp.bfloat16), b3p,
    )
    return params_f32, kernel_params


def dqn_reference(x, params_f32):
    """Plain-JAX f32 reference for correctness check."""
    w1, b1, w2, b2, w3, b3 = params_f32
    h1 = jnp.maximum(x @ w1 + b1, 0.0)
    h2 = jnp.maximum(h1 @ w2 + b2, 0.0)
    return h2 @ w3 + b3


if __name__ == "__main__":
    key = jax.random.PRNGKey(0)
    k_params, k_x = jax.random.split(key)

    # Small, module-consistent shapes; batch 200 is a non-tile-multiple so the padding
    # path is exercised and the grid has 2 blocks (both TensorCores used on v7x).
    batch, input_dim, output_dim = 200, 8, 4
    params_f32, kernel_params = init_dqn_params(k_params, input_dim, output_dim, hidden=128)
    x = jax.random.normal(k_x, (batch, input_dim), jnp.float32)

    out = dqn_forward(x, kernel_params, output_dim)
    out = jax.block_until_ready(out)

    ref = dqn_reference(x, params_f32)
    assert out.shape == (batch, output_dim)
    # bf16 weights/activations with f32 accumulation -> loose tolerance vs f32 reference.
    assert jnp.allclose(out, ref, atol=5e-2, rtol=5e-2), "mismatch vs reference"

    print("KERNEL_OK")
</pallas_src>

<mosaic_0001>
module attributes {stable_mosaic.version = 11 : i64} {
  func.func @_dqn_kernel(%arg0: i32, %arg1: memref<128x8xf32, #tpu.memory_space<vmem>>, %arg2: memref<8x128xbf16, #tpu.memory_space<vmem>>, %arg3: memref<1x128xf32, #tpu.memory_space<vmem>>, %arg4: memref<128x128xbf16, #tpu.memory_space<vmem>>, %arg5: memref<1x128xf32, #tpu.memory_space<vmem>>, %arg6: memref<128x128xbf16, #tpu.memory_space<vmem>>, %arg7: memref<1x128xf32, #tpu.memory_space<vmem>>, %arg8: memref<128x4xf32, #tpu.memory_space<vmem>>) attributes {dimension_semantics = [#tpu.dimension_semantics<parallel>], iteration_bounds = array<i64: 2>, scalar_prefetch = 0 : i64, scratch_operands = 0 : i64, tpu.core_type = #tpu.core_type<tc>, window_params = [{transform_indices = @transform_0, window_bounds = array<i64: 128, 8>}, {pipeline_mode = #tpu.pipeline_mode<synchronous>, transform_indices = @transform_1, window_bounds = array<i64: 8, 128>}, {pipeline_mode = #tpu.pipeline_mode<synchronous>, transform_indices = @transform_2, window_bounds = array<i64: 1, 128>}, {pipeline_mode = #tpu.pipeline_mode<synchronous>, transform_indices = @transform_3, window_bounds = array<i64: 128, 128>}, {pipeline_mode = #tpu.pipeline_mode<synchronous>, transform_indices = @transform_4, window_bounds = array<i64: 1, 128>}, {pipeline_mode = #tpu.pipeline_mode<synchronous>, transform_indices = @transform_5, window_bounds = array<i64: 128, 128>}, {pipeline_mode = #tpu.pipeline_mode<synchronous>, transform_indices = @transform_6, window_bounds = array<i64: 1, 128>}, {transform_indices = @transform_7, window_bounds = array<i64: 128, 4>}]} {
    %c0 = arith.constant 0 : index
    %c0_0 = arith.constant 0 : index
    %0 = vector.load %arg2[%c0, %c0_0] : memref<8x128xbf16, #tpu.memory_space<vmem>>, vector<8x128xbf16>
    %c0_1 = arith.constant 0 : index
    %c0_2 = arith.constant 0 : index
    %1 = vector.load %arg4[%c0_1, %c0_2] : memref<128x128xbf16, #tpu.memory_space<vmem>>, vector<128x128xbf16>
    %c0_3 = arith.constant 0 : index
    %c0_4 = arith.constant 0 : index
    %2 = vector.load %arg6[%c0_3, %c0_4] : memref<128x128xbf16, #tpu.memory_space<vmem>>, vector<128x128xbf16>
    %c0_5 = arith.constant 0 : index
    %c0_6 = arith.constant 0 : index
    %3 = vector.load %arg3[%c0_5, %c0_6] : memref<1x128xf32, #tpu.memory_space<vmem>>, vector<1x128xf32>
    %4 = vector.shape_cast %3 : vector<1x128xf32> to vector<1x128xf32>
    %5 = vector.broadcast %4 : vector<1x128xf32> to vector<128x128xf32>
    %c0_7 = arith.constant 0 : index
    %c0_8 = arith.constant 0 : index
    %6 = vector.load %arg5[%c0_7, %c0_8] : memref<1x128xf32, #tpu.memory_space<vmem>>, vector<1x128xf32>
    %7 = vector.shape_cast %6 : vector<1x128xf32> to vector<1x128xf32>
    %8 = vector.broadcast %7 : vector<1x128xf32> to vector<128x128xf32>
    %c0_9 = arith.constant 0 : index
    %c0_10 = arith.constant 0 : index
    %9 = vector.load %arg7[%c0_9, %c0_10] : memref<1x128xf32, #tpu.memory_space<vmem>>, vector<1x128xf32>
    %10 = vector.shape_cast %9 : vector<1x128xf32> to vector<1x128xf32>
    %11 = vector.broadcast %10 : vector<1x128xf32> to vector<128x128xf32>
    %c0_i32 = arith.constant 0 : i32
    %c128_i32 = arith.constant 128 : i32
    %12 = arith.muli %c0_i32, %c128_i32 : i32
    %13 = tpu.assume_multiple %12, 128 : i32
    %14 = arith.index_cast %13 : i32 to index
    %c0_11 = arith.constant 0 : index
    %15 = vector.load %arg1[%14, %c0_11] : memref<128x8xf32, #tpu.memory_space<vmem>>, vector<128x8xf32>
    %16 = arith.truncf %15 : vector<128x8xf32> to vector<128x8xbf16>
    %cst = arith.constant dense<0.000000e+00> : vector<128x128xf32>
    %17 = tpu.matmul %16, %0, %cst {dimension_numbers = #tpu.dot_dimension_numbers<[1], [0], [0], [1], [0, 0, 1, 1], [], []>} : vector<128x8xbf16>, vector<8x128xbf16>, vector<128x128xf32> -> vector<128x128xf32>
    %18 = arith.addf %17, %5 : vector<128x128xf32>
    %cst_12 = arith.constant 0.000000e+00 : f32
    %19 = vector.broadcast %cst_12 : f32 to vector<128x128xf32>
    %20 = arith.maximumf %18, %19 : vector<128x128xf32>
    %21 = arith.truncf %20 : vector<128x128xf32> to vector<128x128xbf16>
    %cst_13 = arith.constant dense<0.000000e+00> : vector<128x128xf32>
    %22 = tpu.matmul %21, %1, %cst_13 {dimension_numbers = #tpu.dot_dimension_numbers<[1], [0], [0], [1], [0, 0, 1, 1], [], []>} : vector<128x128xbf16>, vector<128x128xbf16>, vector<128x128xf32> -> vector<128x128xf32>
    %23 = arith.addf %22, %8 : vector<128x128xf32>
    %cst_14 = arith.constant 0.000000e+00 : f32
    %24 = vector.broadcast %cst_14 : f32 to vector<128x128xf32>
    %25 = arith.maximumf %23, %24 : vector<128x128xf32>
    %26 = arith.truncf %25 : vector<128x128xf32> to vector<128x128xbf16>
    %cst_15 = arith.constant dense<0.000000e+00> : vector<128x128xf32>
    %27 = tpu.matmul %26, %2, %cst_15 {dimension_numbers = #tpu.dot_dimension_numbers<[1], [0], [0], [1], [0, 0, 1, 1], [], []>} : vector<128x128xbf16>, vector<128x128xbf16>, vector<128x128xf32> -> vector<128x128xf32>
    %28 = arith.addf %27, %11 : vector<128x128xf32>
    %29 = vector.extract_strided_slice %28 {offsets = [0, 0], sizes = [128, 4], strides = [1, 1]} : vector<128x128xf32> to vector<128x4xf32>
    %30 = arith.index_cast %13 : i32 to index
    %c0_16 = arith.constant 0 : index
    %31 = vector.load %arg8[%30, %c0_16] : memref<128x4xf32, #tpu.memory_space<vmem>>, vector<128x4xf32>
    tpu.vector_store %arg8[%30, %c0_16], %29 {strides = array<i32>} : memref<128x4xf32, #tpu.memory_space<vmem>>, vector<128x4xf32>,
    %c1_i32 = arith.constant 1 : i32
    return
  }
  func.func @transform_0(%arg0: i32) -> (i32, i32) {
    %c0_i32 = arith.constant 0 : i32
    %c0_i32_0 = arith.constant 0 : i32
    return %arg0, %c0_i32 : i32, i32
  }
  func.func @transform_1(%arg0: i32) -> (i32, i32) {
    %c0_i32 = arith.constant 0 : i32
    %c0_i32_0 = arith.constant 0 : i32
    %c0_i32_1 = arith.constant 0 : i32
    return %c0_i32, %c0_i32_0 : i32, i32
  }
  func.func @transform_2(%arg0: i32) -> (i32, i32) {
    %c0_i32 = arith.constant 0 : i32
    %c0_i32_0 = arith.constant 0 : i32
    %c0_i32_1 = arith.constant 0 : i32
    return %c0_i32, %c0_i32_0 : i32, i32
  }
  func.func @transform_3(%arg0: i32) -> (i32, i32) {
    %c0_i32 = arith.constant 0 : i32
    %c0_i32_0 = arith.constant 0 : i32
    %c0_i32_1 = arith.constant 0 : i32
    return %c0_i32, %c0_i32_0 : i32, i32
  }
  func.func @transform_4(%arg0: i32) -> (i32, i32) {
    %c0_i32 = arith.constant 0 : i32
    %c0_i32_0 = arith.constant 0 : i32
    %c0_i32_1 = arith.constant 0 : i32
    return %c0_i32, %c0_i32_0 : i32, i32
  }
  func.func @transform_5(%arg0: i32) -> (i32, i32) {
    %c0_i32 = arith.constant 0 : i32
    %c0_i32_0 = arith.constant 0 : i32
    %c0_i32_1 = arith.constant 0 : i32
    return %c0_i32, %c0_i32_0 : i32, i32
  }
  func.func @transform_6(%arg0: i32) -> (i32, i32) {
    %c0_i32 = arith.constant 0 : i32
    %c0_i32_0 = arith.constant 0 : i32
    %c0_i32_1 = arith.constant 0 : i32
    return %c0_i32, %c0_i32_0 : i32, i32
  }
  func.func @transform_7(%arg0: i32) -> (i32, i32) {
    %c0_i32 = arith.constant 0 : i32
    %c0_i32_0 = arith.constant 0 : i32
    return %arg0, %c0_i32 : i32, i32
  }
}

</mosaic_0001>

<llo_original>
// kernel: tpu_custom_call.1
$region0: #{tpu_custom_call.1}
  #allocation0 [shape = 'u32[]', space=smem, size = 0x4, offset = 0x4, fixed_abs, tag = 'smem constant byte address 0x4 - core index']
  #allocation1 [shape = 'u32[72,128]{1,0:T(1,128)}', space=vmem, size = 0x9000, scoped, tag = 'internal scratch']
  %s0 = inlined_call_operand.vmem [shape: f32[256,8], index: 0, kind: input, shape index: {}]
  %s1 = inlined_call_operand.vmem [shape: bf16[8,128], index: 1, kind: input, shape index: {}]
  %s2 = inlined_call_operand.vmem [shape: f32[1,128], index: 2, kind: input, shape index: {}]
  %s3 = inlined_call_operand.vmem [shape: bf16[128,128], index: 3, kind: input, shape index: {}]
  %s4 = inlined_call_operand.vmem [shape: f32[1,128], index: 4, kind: input, shape index: {}]
  %s5 = inlined_call_operand.vmem [shape: bf16[128,128], index: 5, kind: input, shape index: {}]
  %s6 = inlined_call_operand.vmem [shape: f32[1,128], index: 6, kind: input, shape index: {}]
  %s7 = inlined_call_operand.vmem [shape: f32[256,4], index: 7, kind: output, shape index: {}]
  %s8 = sld [smem:[#allocation0]]
  $region61: #{tpu_custom_call.1} parent=0
    _
  %s10 = ssub.s32 1, %s8
  %s11 = scalar_select 0, %s10, %s8
  loop: start=0, step=1, limit=4
  $region2: #{tpu_custom_call.1} parent=0 // loop_pre_header
    _
  $region3: #{tpu_custom_call.1} parent=0 // loop_header
    %s13 = sphi 0, %s17
    %p14 = scmp.ge.s32.totalorder %s13, 4
    %s23 = sphi 0, %s25
    %s26 = sphi 0, %s23
    %s27 = sphi 0, %s26
    %s43 = sphi 0, %s27
    %s47 = sphi 0, %s47
    %s49 = sphi 0, %s47
    %s50 = sphi 0, %s49
    %s64 = sphi 0, %s50
    %s68 = sphi 0, %s68
    %s70 = sphi 0, %s68
    %s71 = sphi 0, %s70
    %s85 = sphi 0, %s71
    %s89 = sphi 0, %s89
    %s91 = sphi 0, %s89
    %s92 = sphi 0, %s91
    %s106 = sphi 0, %s92
    %s110 = sphi 0, %s110
    %s112 = sphi 0, %s110
    %s113 = sphi 0, %s112
    %s127 = sphi 0, %s113
    %s131 = sphi 0, %s131
    %s133 = sphi 0, %s131
    %s134 = sphi 0, %s133
    %s148 = sphi 0, %s134
    %s152 = sphi 0, %s152
    %s154 = sphi 0, %s152
    %s155 = sphi 0, %s154
    %s169 = sphi 0, %s155
    %s175 = sphi 0, %s177
    %s178 = sphi 0, %s175
    %s179 = sphi 0, %s178
    %s195 = sphi 0, %s179
  $region4: #{tpu_custom_call.1} parent=0 // loop_header_branch
    %16 = sbr.rel (%p14) target = $region8
  $region5: #{tpu_custom_call.1} parent=0 // loop_body
    %s18 = ssub.s32 %s13, 1
    %s19 = ssub.s32 %s13, 2
    %s20 = sadd.s32 %s13, 1
    %s21 = ssub.s32 %s13, %s20
    %p22 = scmp.eq.s32.totalorder %s21, 0
    %s24 = sadd.s32 %s23, 1
    %s25 = scalar_select %p22, %s23, %s24
    %p28 = pneg %p22
    %p29 = scmp.eq.s32.totalorder %s13, 1
    %p30 = por %p28, %p29
    %p31 = scmp.ne.s32.totalorder %s23, %s26
    %p32 = scmp.eq.s32.totalorder %s13, 0
    %p33 = por %p31, %p32
    %p34 = scmp.ne.s32.totalorder %s23, %s26
    %p35 = scmp.eq.s32.totalorder %s18, 1
    %p36 = por %p34, %p35
    %p37 = scmp.ne.s32.totalorder %s26, %s27
    %p38 = scmp.eq.s32.totalorder %s18, 0
    %p39 = por %p37, %p38
    %p40 = scmp.ne.s32.totalorder %s26, %s27
    %p41 = scmp.eq.s32.totalorder %s19, 1
    %p42 = por %p40, %p41
    %p44 = scmp.ne.s32.totalorder %s27, %s43
    %p45 = scmp.eq.s32.totalorder %s19, 0
    %p46 = por %p44, %p45
    %s48 = sadd.s32 %s47, 1
    %p51 = scmp.eq.s32.totalorder %s13, 1
    %p52 = scmp.ne.s32.totalorder %s47, %s49
    %p53 = scmp.eq.s32.totalorder %s13, 0
    %p54 = por %p52, %p53
    %p55 = scmp.ne.s32.totalorder %s47, %s49
    %p56 = scmp.eq.s32.totalorder %s18, 1
    %p57 = por %p55, %p56
    %p58 = scmp.ne.s32.totalorder %s49, %s50
    %p59 = scmp.eq.s32.totalorder %s18, 0
    %p60 = por %p58, %p59
    %p61 = scmp.ne.s32.totalorder %s49, %s50
    %p62 = scmp.eq.s32.totalorder %s19, 1
    %p63 = por %p61, %p62
    %p65 = scmp.ne.s32.totalorder %s50, %s64
    %p66 = scmp.eq.s32.totalorder %s19, 0
    %p67 = por %p65, %p66
    %s69 = sadd.s32 %s68, 1
    %p72 = scmp.eq.s32.totalorder %s13, 1
    %p73 = scmp.ne.s32.totalorder %s68, %s70
    %p74 = scmp.eq.s32.totalorder %s13, 0
    %p75 = por %p73, %p74
    %p76 = scmp.ne.s32.totalorder %s68, %s70
    %p77 = scmp.eq.s32.totalorder %s18, 1
    %p78 = por %p76, %p77
    %p79 = scmp.ne.s32.totalorder %s70, %s71
    %p80 = scmp.eq.s32.totalorder %s18, 0
    %p81 = por %p79, %p80
    %p82 = scmp.ne.s32.totalorder %s70, %s71
    %p83 = scmp.eq.s32.totalorder %s19, 1
    %p84 = por %p82, %p83
    %p86 = scmp.ne.s32.totalorder %s71, %s85
    %p87 = scmp.eq.s32.totalorder %s19, 0
    %p88 = por %p86, %p87
    %s90 = sadd.s32 %s89, 1
    %p93 = scmp.eq.s32.totalorder %s13, 1
    %p94 = scmp.ne.s32.totalorder %s89, %s91
    %p95 = scmp.eq.s32.totalorder %s13, 0
    %p96 = por %p94, %p95
    %p97 = scmp.ne.s32.totalorder %s89, %s91
    %p98 = scmp.eq.s32.totalorder %s18, 1
    %p99 = por %p97, %p98
    %p100 = scmp.ne.s32.totalorder %s91, %s92
    %p101 = scmp.eq.s32.totalorder %s18, 0
    %p102 = por %p100, %p101
    %p103 = scmp.ne.s32.totalorder %s91, %s92
    %p104 = scmp.eq.s32.totalorder %s19, 1
    %p105 = por %p103, %p104
    %p107 = scmp.ne.s32.totalorder %s92, %s106
    %p108 = scmp.eq.s32.totalorder %s19, 0
    %p109 = por %p107, %p108
    %s111 = sadd.s32 %s110, 1
    %p114 = scmp.eq.s32.totalorder %s13, 1
    %p115 = scmp.ne.s32.totalorder %s110, %s112
    %p116 = scmp.eq.s32.totalorder %s13, 0
    %p117 = por %p115, %p116
    %p118 = scmp.ne.s32.totalorder %s110, %s112
    %p119 = scmp.eq.s32.totalorder %s18, 1
    %p120 = por %p118, %p119
    %p121 = scmp.ne.s32.totalorder %s112, %s113
    %p122 = scmp.eq.s32.totalorder %s18, 0
    %p123 = por %p121, %p122
    %p124 = scmp.ne.s32.totalorder %s112, %s113
    %p125 = scmp.eq.s32.totalorder %s19, 1
    %p126 = por %p124, %p125
    %p128 = scmp.ne.s32.totalorder %s113, %s127
    %p129 = scmp.eq.s32.totalorder %s19, 0
    %p130 = por %p128, %p129
    %s132 = sadd.s32 %s131, 1
    %p135 = scmp.eq.s32.totalorder %s13, 1
    %p136 = scmp.ne.s32.totalorder %s131, %s133
    %p137 = scmp.eq.s32.totalorder %s13, 0
    %p138 = por %p136, %p137
    %p139 = scmp.ne.s32.totalorder %s131, %s133
    %p140 = scmp.eq.s32.totalorder %s18, 1
    %p141 = por %p139, %p140
    %p142 = scmp.ne.s32.totalorder %s133, %s134
    %p143 = scmp.eq.s32.totalorder %s18, 0
    %p144 = por %p142, %p143
    %p145 = scmp.ne.s32.totalorder %s133, %s134
    %p146 = scmp.eq.s32.totalorder %s19, 1
    %p147 = por %p145, %p146
    %p149 = scmp.ne.s32.totalorder %s134, %s148
    %p150 = scmp.eq.s32.totalorder %s19, 0
    %p151 = por %p149, %p150
    %s153 = sadd.s32 %s152, 1
    %p156 = scmp.eq.s32.totalorder %s13, 1
    %p157 = scmp.ne.s32.totalorder %s152, %s154
    %p158 = scmp.eq.s32.totalorder %s13, 0
    %p159 = por %p157, %p158
    %p160 = scmp.ne.s32.totalorder %s152, %s154
    %p161 = scmp.eq.s32.totalorder %s18, 1
    %p162 = por %p160, %p161
    %p163 = scmp.ne.s32.totalorder %s154, %s155
    %p164 = scmp.eq.s32.totalorder %s18, 0
    %p165 = por %p163, %p164
    %p166 = scmp.ne.s32.totalorder %s154, %s155
    %p167 = scmp.eq.s32.totalorder %s19, 1
    %p168 = por %p166, %p167
    %p170 = scmp.ne.s32.totalorder %s155, %s169
    %p171 = scmp.eq.s32.totalorder %s19, 0
    %p172 = por %p170, %p171
    %s173 = ssub.s32 %s13, %s20
    %p174 = scmp.eq.s32.totalorder %s173, 0
    %s176 = sadd.s32 %s175, 1
    %s177 = scalar_select %p174, %s175, %s176
    %p180 = pneg %p174
    %p181 = scmp.eq.s32.totalorder %s13, 1
    %p182 = por %p180, %p181
    %p183 = scmp.ne.s32.totalorder %s175, %s178
    %p184 = scmp.eq.s32.totalorder %s13, 0
    %p185 = por %p183, %p184
    %p186 = scmp.ne.s32.totalorder %s175, %s178
    %p187 = scmp.eq.s32.totalorder %s18, 1
    %p188 = por %p186, %p187
    %p189 = scmp.ne.s32.totalorder %s178, %s179
    %p190 = scmp.eq.s32.totalorder %s18, 0
    %p191 = por %p189, %p190
    %p192 = scmp.ne.s32.totalorder %s178, %s179
    %p193 = scmp.eq.s32.totalorder %s19, 1
    %p194 = por %p192, %p193
    %p196 = scmp.ne.s32.totalorder %s179, %s195
    %p197 = scmp.eq.s32.totalorder %s19, 0
    %p198 = por %p196, %p197
    %p199 = scmp.le.s32.totalorder 1, %s13
    %p200 = scmp.lt.s32.totalorder %s13, 3
    %p201 = pnand %p199, %p200
    %p202 = pneg %p201
    // Predicated region
    $region9: #{tpu_custom_call.1} parent=5 // pred_check
      _
    $region10: #{tpu_custom_call.1} parent=5 // pred_check_branch
      %204 = sbr.rel (%p201) target = $region12
    $region11: #{tpu_custom_call.1} parent=5 // pred_region
      %s205 = ssub.s32 %s13, 1
      // Predicated region
      $region13: #{tpu_custom_call.1} parent=11 // pred_check
        %p206 = pneg %p60
      $region14: #{tpu_custom_call.1} parent=11 // pred_check_branch
        %208 = sbr.rel (%p206) target = $region16
      $region15: #{tpu_custom_call.1} parent=11 // pred_region
        _
      $region16: #{tpu_custom_call.1} parent=11 // pred_fallthru
        _
      // Predicated region
      $region17: #{tpu_custom_call.1} parent=11 // pred_check
        %p209 = pneg %p81
      $region18: #{tpu_custom_call.1} parent=11 // pred_check_branch
        %211 = sbr.rel (%p209) target = $region20
      $region19: #{tpu_custom_call.1} parent=11 // pred_region
        _
      $region20: #{tpu_custom_call.1} parent=11 // pred_fallthru
        _
      // Predicated region
      $region21: #{tpu_custom_call.1} parent=11 // pred_check
        %p212 = pneg %p102
      $region22: #{tpu_custom_call.1} parent=11 // pred_check_branch
        %214 = sbr.rel (%p212) target = $region24
      $region23: #{tpu_custom_call.1} parent=11 // pred_region
        _
      $region24: #{tpu_custom_call.1} parent=11 // pred_fallthru
        _
      // Predicated region
      $region25: #{tpu_custom_call.1} parent=11 // pred_check
        %p215 = pneg %p123
      $region26: #{tpu_custom_call.1} parent=11 // pred_check_branch
        %217 = sbr.rel (%p215) target = $region28
      $region27: #{tpu_custom_call.1} parent=11 // pred_region
        _
      $region28: #{tpu_custom_call.1} parent=11 // pred_fallthru
        _
      // Predicated region
      $region29: #{tpu_custom_call.1} parent=11 // pred_check
        %p218 = pneg %p144
      $region30: #{tpu_custom_call.1} parent=11 // pred_check_branch
        %220 = sbr.rel (%p218) target = $region32
      $region31: #{tpu_custom_call.1} parent=11 // pred_region
        _
      $region32: #{tpu_custom_call.1} parent=11 // pred_fallthru
        _
      // Predicated region
      $region33: #{tpu_custom_call.1} parent=11 // pred_check
        %p221 = pneg %p165
      $region34: #{tpu_custom_call.1} parent=11 // pred_check_branch
        %223 = sbr.rel (%p221) target = $region36
      $region35: #{tpu_custom_call.1} parent=11 // pred_region
        _
      $region36: #{tpu_custom_call.1} parent=11 // pred_fallthru
        _
    $region12: #{tpu_custom_call.1} parent=5 // pred_fallthru
      _
    %p224 = scmp.lt.s32.totalorder %s13, 2
    // Predicated region
    $region37: #{tpu_custom_call.1} parent=5 // pred_check
      %p225 = pneg %p224
    $region38: #{tpu_custom_call.1} parent=5 // pred_check_branch
      %227 = sbr.rel (%p225) target = $region40
    $region39: #{tpu_custom_call.1} parent=5 // pred_region
      // Predicated region
      $region41: #{tpu_custom_call.1} parent=39 // pred_check
        %p228 = pneg %p33
      $region42: #{tpu_custom_call.1} parent=39 // pred_check_branch
        %230 = sbr.rel (%p228) target = $region44
      $region43: #{tpu_custom_call.1} parent=39 // pred_region
        %s231 = smul.u32 16, %s13
        %p232 = scmp.lt.s32.totalorder %s231, 31
        %s233 = scalar_select %p232, %s231, 31
        %s234 = smul.addr %s233, 8
        %s235 = scalar_lea.vmem %s0, %s234
        %s236 = smul.u32 16, %s13
      $region44: #{tpu_custom_call.1} parent=39 // pred_fallthru
        _
    $region40: #{tpu_custom_call.1} parent=5 // pred_fallthru
      _
    %p237 = scmp.le.s32.totalorder 1, %s13
    %p238 = scmp.lt.s32.totalorder %s13, 3
    %p239 = pnand %p237, %p238
    %p240 = pneg %p239
    // Predicated region
    $region45: #{tpu_custom_call.1} parent=5 // pred_check
      _
    $region46: #{tpu_custom_call.1} parent=5 // pred_check_branch
      %242 = sbr.rel (%p239) target = $region48
    $region47: #{tpu_custom_call.1} parent=5 // pred_region
      %s243 = ssub.s32 %s13, 1
      %s244 = smul.u32 16, %s18
      %p245 = scmp.lt.s32.totalorder %s244, 31
      %s246 = scalar_select %p245, %s244, 31
      %s247 = smul.addr %s246, 8
      %s248 = scalar_lea.vmem %s0, %s247
      %p249 = pneg %p39
      %p250 = pneg %p36
      %p251 = pneg %p60
      %p252 = pneg %p57
      %p253 = pneg %p81
      %p254 = pneg %p78
      %p255 = pneg %p102
      %p256 = pneg %p99
      %p257 = pneg %p123
      %p258 = pneg %p120
      %p259 = pneg %p144
      %p260 = pneg %p141
      %p261 = pneg %p165
      %p262 = pneg %p162
      %p263 = pneg %p191
      %p264 = pneg %p188
      %s265 = smul.u32 16, %s18
      %p266 = scmp.lt.s32.totalorder %s265, 31
      %s267 = scalar_select %p266, %s265, 31
      %s268 = smul.addr %s267, 8
      %s269 = scalar_lea.vmem %s7, %s268
      %s270 = smul.u32 16, %s18
      %p271 = scmp.lt.s32.totalorder %s270, 31
      %s272 = scalar_select %p271, %s270, 31
      %s273 = smul.addr %s272, 8
      %s274 = scalar_lea.vmem %s0, %s273
      %s275 = smul.u32 16, %s18
      %s276 = smul.u32 16, %s18
      %p277 = scmp.lt.s32.totalorder %s276, 31
      %s278 = scalar_select %p277, %s276, 31
      %s279 = smul.addr %s278, 8
      %s280 = scalar_lea.vmem %s7, %s279
      %s281 = smul.u32 16, %s18
      %v283 = vld [vmem:[%s1] sm:$0xf]
      %v284 = vld [vmem:[%s3] sm:$0xf]
      %v285 = vld [vmem:[%s3 + $0x4] sm:$0xf]
      %v286 = vld [vmem:[%s3 + $0x8] sm:$0xf]
      %v287 = vld [vmem:[%s3 + $0xc] sm:$0xf]
      %v288 = vld [vmem:[%s3 + $0x10] sm:$0xf]
      %v289 = vld [vmem:[%s3 + $0x14] sm:$0xf]
      %v290 = vld [vmem:[%s3 + $0x18] sm:$0xf]
      %v291 = vld [vmem:[%s3 + $0x1c] sm:$0xf]
      %v292 = vld [vmem:[%s3 + $0x20] sm:$0xf]
      %v293 = vld [vmem:[%s3 + $0x24] sm:$0xf]
      %v294 = vld [vmem:[%s3 + $0x28] sm:$0xf]
      %v295 = vld [vmem:[%s3 + $0x2c] sm:$0xf]
      %v296 = vld [vmem:[%s3 + $0x30] sm:$0xf]
      %v297 = vld [vmem:[%s3 + $0x34] sm:$0xf]
      %v298 = vld [vmem:[%s3 + $0x38] sm:$0xf]
      %v299 = vld [vmem:[%s3 + $0x3c] sm:$0xf]
      %v300 = vld [vmem:[%s5] sm:$0xf]
      %v301 = vld [vmem:[%s5 + $0x4] sm:$0xf]
      %v302 = vld [vmem:[%s5 + $0x8] sm:$0xf]
      %v303 = vld [vmem:[%s5 + $0xc] sm:$0xf]
      %v304 = vld [vmem:[%s5 + $0x10] sm:$0xf]
      %v305 = vld [vmem:[%s5 + $0x14] sm:$0xf]
      %v306 = vld [vmem:[%s5 + $0x18] sm:$0xf]
      %v307 = vld [vmem:[%s5 + $0x1c] sm:$0xf]
      %v308 = vld [vmem:[%s5 + $0x20] sm:$0xf]
      %v309 = vld [vmem:[%s5 + $0x24] sm:$0xf]
      %v310 = vld [vmem:[%s5 + $0x28] sm:$0xf]
      %v311 = vld [vmem:[%s5 + $0x2c] sm:$0xf]
      %v312 = vld [vmem:[%s5 + $0x30] sm:$0xf]
      %v313 = vld [vmem:[%s5 + $0x34] sm:$0xf]
      %v314 = vld [vmem:[%s5 + $0x38] sm:$0xf]
      %v315 = vld [vmem:[%s5 + $0x3c] sm:$0xf]
      %v316 = vld [vmem:[%s2] sm:$0x1]
      %v318 = vperm.slane %v316, 0
      %v320 = vld [vmem:[%s4] sm:$0x1]
      %v322 = vperm.slane %v320, 0
      %v324 = vld [vmem:[%s6] sm:$0x1]
      %v326 = vperm.slane %v324, 0
      %v328 = vld [vmem:[%s274] sm:$0xff]
      %v329 = vld [vmem:[%s274 + $0x8] sm:$0xff]
      %v330 = vld [vmem:[%s274 + $0x10] sm:$0xff]
      %v331 = vld [vmem:[%s274 + $0x18] sm:$0xff]
      %v332 = vld [vmem:[%s274 + $0x20] sm:$0xff]
      %v333 = vld [vmem:[%s274 + $0x28] sm:$0xff]
      %v334 = vld [vmem:[%s274 + $0x30] sm:$0xff]
      %v335 = vld [vmem:[%s274 + $0x38] sm:$0xff]
      %v336 = vld [vmem:[%s274 + $0x40] sm:$0xff]
      %v337 = vld [vmem:[%s274 + $0x48] sm:$0xff]
      %v338 = vld [vmem:[%s274 + $0x50] sm:$0xff]
      %v339 = vld [vmem:[%s274 + $0x58] sm:$0xff]
      %v340 = vld [vmem:[%s274 + $0x60] sm:$0xff]
      %v341 = vld [vmem:[%s274 + $0x68] sm:$0xff]
      %v342 = vld [vmem:[%s274 + $0x70] sm:$0xff]
      %v343 = vld [vmem:[%s274 + $0x78] sm:$0xff]
      %v344 = vpack.c.bf16 %v329, %v328
      %v345 = vpack.c.bf16 %v331, %v330
      %v346 = vpack.c.bf16 %v333, %v332
      %v347 = vpack.c.bf16 %v335, %v334
      %v348 = vpack.c.bf16 %v337, %v336
      %v349 = vpack.c.bf16 %v339, %v338
      %v350 = vpack.c.bf16 %v341, %v340
      %v351 = vpack.c.bf16 %v343, %v342
      %vm352 = vcmask 64512
      %v354 = vsel %vm352, %v344, 0
      %v357 = vsel %vm352, %v345, 0
      %v360 = vsel %vm352, %v346, 0
      %v363 = vsel %vm352, %v347, 0
      %v366 = vsel %vm352, %v348, 0
      %v369 = vsel %vm352, %v349, 0
      %v372 = vsel %vm352, %v350, 0
      %v375 = vsel %vm352, %v351, 0
      %vm377 = vcmask 1043456
      %v379 = vsel %vm377, %v283, 0
      %381 = vmatpush.bf16.msra.mxu0 0
      %382 = vmatpush.bf16.msra.mxu0 0
      %383 = vmatpush.bf16.msra.mxu0 0
      %384 = vmatpush.bf16.msra.mxu0 0
      %385 = vmatpush.bf16.msra.mxu0 0
      %386 = vmatpush.bf16.msra.mxu0 0
      %387 = vmatpush.bf16.msra.mxu0 0
      %388 = vmatpush.bf16.msra.mxu0 %v379
      %389 = vmatmul.bf16.gmra.mxu0 %v354
      %v390 = vpop.f32.mrf.mxu0
      %v391 = vadd.f32 %v318, %v390
      %v392 = vpop.f32.mrf.mxu0
      %v393 = vadd.f32 %v318, %v392
      %394 = vmatmul.bf16.gmra.mxu0 %v357
      %v395 = vpop.f32.mrf.mxu0
      %v396 = vadd.f32 %v318, %v395
      %v397 = vpop.f32.mrf.mxu0
      %v398 = vadd.f32 %v318, %v397
      %399 = vmatmul.bf16.gmra.mxu0 %v360
      %v400 = vpop.f32.mrf.mxu0
      %v401 = vadd.f32 %v318, %v400
      %v402 = vpop.f32.mrf.mxu0
      %v403 = vadd.f32 %v318, %v402
      %404 = vmatmul.bf16.gmra.mxu0 %v363
      %v405 = vpop.f32.mrf.mxu0
      %v406 = vadd.f32 %v318, %v405
      %v407 = vpop.f32.mrf.mxu0
      %v408 = vadd.f32 %v318, %v407
      %409 = vmatmul.bf16.gmra.mxu0 %v366
      %v410 = vpop.f32.mrf.mxu0
      %v411 = vadd.f32 %v318, %v410
      %v412 = vpop.f32.mrf.mxu0
      %v413 = vadd.f32 %v318, %v412
      %414 = vmatmul.bf16.gmra.mxu0 %v369
      %v415 = vpop.f32.mrf.mxu0
      %v416 = vadd.f32 %v318, %v415
      %v417 = vpop.f32.mrf.mxu0
      %v418 = vadd.f32 %v318, %v417
      %419 = vmatmul.bf16.gmra.mxu0 %v372
      %v420 = vpop.f32.mrf.mxu0
      %v421 = vadd.f32 %v318, %v420
      %v422 = vpop.f32.mrf.mxu0
      %v423 = vadd.f32 %v318, %v422
      %424 = vmatmul.bf16.gmra.mxu0 %v375
      %v425 = vpop.f32.mrf.mxu0
      %v426 = vadd.f32 %v318, %v425
      %v427 = vpop.f32.mrf.mxu0
      %v428 = vadd.f32 %v318, %v427
      %429 = vdwg.mxu0
      %v430 = vmax.f32 %v391, 0.0
      %v431 = vmax.f32 %v393, 0.0
      %v432 = vmax.f32 %v396, 0.0
      %v433 = vmax.f32 %v398, 0.0
      %v434 = vmax.f32 %v401, 0.0
      %v435 = vmax.f32 %v403, 0.0
      %v436 = vmax.f32 %v406, 0.0
      %v437 = vmax.f32 %v408, 0.0
      %v438 = vmax.f32 %v411, 0.0
      %v439 = vmax.f32 %v413, 0.0
      %v440 = vmax.f32 %v416, 0.0
      %v441 = vmax.f32 %v418, 0.0
      %v442 = vmax.f32 %v421, 0.0
      %v443 = vmax.f32 %v423, 0.0
      %v444 = vmax.f32 %v426, 0.0
      %v445 = vmax.f32 %v428, 0.0
      %v446 = vpack.c.bf16 %v431, %v430
      %v447 = vpack.c.bf16 %v433, %v432
      %v448 = vpack.c.bf16 %v435, %v434
      %v449 = vpack.c.bf16 %v437, %v436
      %v450 = vpack.c.bf16 %v439, %v438
      %v451 = vpack.c.bf16 %v441, %v440
      %v452 = vpack.c.bf16 %v443, %v442
      %v453 = vpack.c.bf16 %v445, %v444
      %v470 = vunpack.c.l.b16 %v284
      %v471 = vunpack.c.l.b16 %v285
      %v472 = vunpack.c.l.b16 %v286
      %v473 = vunpack.c.l.b16 %v287
      %v474 = vunpack.c.l.b16 %v288
      %v475 = vunpack.c.l.b16 %v289
      %v476 = vunpack.c.l.b16 %v290
      %v477 = vunpack.c.l.b16 %v291
      %v478 = vunpack.c.l.b16 %v292
      %v479 = vunpack.c.l.b16 %v293
      %v480 = vunpack.c.l.b16 %v294
      %v481 = vunpack.c.l.b16 %v295
      %v482 = vunpack.c.l.b16 %v296
      %v483 = vunpack.c.l.b16 %v297
      %v484 = vunpack.c.l.b16 %v298
      %v485 = vunpack.c.l.b16 %v299
      %v486 = vpack.c.b16 %v471, %v470
      %v487 = vpack.c.b16 %v473, %v472
      %v488 = vpack.c.b16 %v475, %v474
      %v489 = vpack.c.b16 %v477, %v476
      %v490 = vpack.c.b16 %v479, %v478
      %v491 = vpack.c.b16 %v481, %v480
      %v492 = vpack.c.b16 %v483, %v482
      %v493 = vpack.c.b16 %v485, %v484
      %502 = vmatpush.bf16.msra.mxu0 %v493
      %503 = vmatpush.bf16.msra.mxu0 %v492
      %504 = vmatpush.bf16.msra.mxu0 %v491
      %505 = vmatpush.bf16.msra.mxu0 %v490
      %506 = vmatpush.bf16.msra.mxu0 %v489
      %507 = vmatpush.bf16.msra.mxu0 %v488
      %508 = vmatpush.bf16.msra.mxu0 %v487
      %509 = vmatpush.bf16.msra.mxu0 %v486
      %510 = vmatmul.bf16.gmra.mxu0 %v446
      %v511 = vpop.f32.mrf.mxu0
      %v512 = vadd.f32 %v322, %v511
      %v513 = vpop.f32.mrf.mxu0
      %v514 = vadd.f32 %v322, %v513
      %515 = vmatmul.bf16.gmra.mxu0 %v447
      %v516 = vpop.f32.mrf.mxu0
      %v517 = vadd.f32 %v322, %v516
      %v518 = vpop.f32.mrf.mxu0
      %v519 = vadd.f32 %v322, %v518
      %520 = vmatmul.bf16.gmra.mxu0 %v448
      %v521 = vpop.f32.mrf.mxu0
      %v522 = vadd.f32 %v322, %v521
      %v523 = vpop.f32.mrf.mxu0
      %v524 = vadd.f32 %v322, %v523
      %525 = vmatmul.bf16.gmra.mxu0 %v449
      %v526 = vpop.f32.mrf.mxu0
      %v527 = vadd.f32 %v322, %v526
      %v528 = vpop.f32.mrf.mxu0
      %v529 = vadd.f32 %v322, %v528
      %530 = vmatmul.bf16.gmra.mxu0 %v450
      %v531 = vpop.f32.mrf.mxu0
      %v532 = vadd.f32 %v322, %v531
      %v533 = vpop.f32.mrf.mxu0
      %v534 = vadd.f32 %v322, %v533
      %535 = vmatmul.bf16.gmra.mxu0 %v451
      %v536 = vpop.f32.mrf.mxu0
      %v537 = vadd.f32 %v322, %v536
      %v538 = vpop.f32.mrf.mxu0
      %v539 = vadd.f32 %v322, %v538
      %540 = vmatmul.bf16.gmra.mxu0 %v452
      %v541 = vpop.f32.mrf.mxu0
      %v542 = vadd.f32 %v322, %v541
      %v543 = vpop.f32.mrf.mxu0
      %v544 = vadd.f32 %v322, %v543
      %545 = vmatmul.bf16.gmra.mxu0 %v453
      %v546 = vpop.f32.mrf.mxu0
      %v547 = vadd.f32 %v322, %v546
      %v548 = vpop.f32.mrf.mxu0
      %v549 = vadd.f32 %v322, %v548
      %550 = vdwg.mxu0
      %v551 = vmax.f32 %v512, 0.0
      %v552 = vmax.f32 %v514, 0.0
      %v553 = vmax.f32 %v517, 0.0
      %v554 = vmax.f32 %v519, 0.0
      %v555 = vmax.f32 %v522, 0.0
      %v556 = vmax.f32 %v524, 0.0
      %v557 = vmax.f32 %v527, 0.0
      %v558 = vmax.f32 %v529, 0.0
      %v559 = vmax.f32 %v532, 0.0
      %v560 = vmax.f32 %v534, 0.0
      %v561 = vmax.f32 %v537, 0.0
      %v562 = vmax.f32 %v539, 0.0
      %v563 = vmax.f32 %v542, 0.0
      %v564 = vmax.f32 %v544, 0.0
      %v565 = vmax.f32 %v547, 0.0
      %v566 = vmax.f32 %v549, 0.0
      %v567 = vpack.c.bf16 %v552, %v551
      %v568 = vpack.c.bf16 %v554, %v553
      %v569 = vpack.c.bf16 %v556, %v555
      %v570 = vpack.c.bf16 %v558, %v557
      %v571 = vpack.c.bf16 %v560, %v559
      %v572 = vpack.c.bf16 %v562, %v561
      %v573 = vpack.c.bf16 %v564, %v563
      %v574 = vpack.c.bf16 %v566, %v565
      %v591 = vunpack.c.l.b16 %v300
      %v592 = vunpack.c.l.b16 %v301
      %v593 = vunpack.c.l.b16 %v302
      %v594 = vunpack.c.l.b16 %v303
      %v595 = vunpack.c.l.b16 %v304
      %v596 = vunpack.c.l.b16 %v305
      %v597 = vunpack.c.l.b16 %v306
      %v598 = vunpack.c.l.b16 %v307
      %v599 = vunpack.c.l.b16 %v308
      %v600 = vunpack.c.l.b16 %v309
      %v601 = vunpack.c.l.b16 %v310
      %v602 = vunpack.c.l.b16 %v311
      %v603 = vunpack.c.l.b16 %v312
      %v604 = vunpack.c.l.b16 %v313
      %v605 = vunpack.c.l.b16 %v314
      %v606 = vunpack.c.l.b16 %v315
      %v607 = vpack.c.b16 %v592, %v591
      %v608 = vpack.c.b16 %v594, %v593
      %v609 = vpack.c.b16 %v596, %v595
      %v610 = vpack.c.b16 %v598, %v597
      %v611 = vpack.c.b16 %v600, %v599
      %v612 = vpack.c.b16 %v602, %v601
      %v613 = vpack.c.b16 %v604, %v603
      %v614 = vpack.c.b16 %v606, %v605
      %623 = vmatpush.bf16.msra.mxu0 %v614
      %624 = vmatpush.bf16.msra.mxu0 %v613
      %625 = vmatpush.bf16.msra.mxu0 %v612
      %626 = vmatpush.bf16.msra.mxu0 %v611
      %627 = vmatpush.bf16.msra.mxu0 %v610
      %628 = vmatpush.bf16.msra.mxu0 %v609
      %629 = vmatpush.bf16.msra.mxu0 %v608
      %630 = vmatpush.bf16.msra.mxu0 %v607
      %631 = vmatmul.bf16.gmra.mxu0 %v567
      %v632 = vpop.f32.mrf.mxu0
      %v633 = vadd.f32 %v326, %v632
      %v634 = vpop.f32.mrf.mxu0
      %v635 = vadd.f32 %v326, %v634
      %636 = vmatmul.bf16.gmra.mxu0 %v568
      %v637 = vpop.f32.mrf.mxu0
      %v638 = vadd.f32 %v326, %v637
      %v639 = vpop.f32.mrf.mxu0
      %v640 = vadd.f32 %v326, %v639
      %641 = vmatmul.bf16.gmra.mxu0 %v569
      %v642 = vpop.f32.mrf.mxu0
      %v643 = vadd.f32 %v326, %v642
      %v644 = vpop.f32.mrf.mxu0
      %v645 = vadd.f32 %v326, %v644
      %646 = vmatmul.bf16.gmra.mxu0 %v570
      %v647 = vpop.f32.mrf.mxu0
      %v648 = vadd.f32 %v326, %v647
      %v649 = vpop.f32.mrf.mxu0
      %v650 = vadd.f32 %v326, %v649
      %651 = vmatmul.bf16.gmra.mxu0 %v571
      %v652 = vpop.f32.mrf.mxu0
      %v653 = vadd.f32 %v326, %v652
      %v654 = vpop.f32.mrf.mxu0
      %v655 = vadd.f32 %v326, %v654
      %656 = vmatmul.bf16.gmra.mxu0 %v572
      %v657 = vpop.f32.mrf.mxu0
      %v658 = vadd.f32 %v326, %v657
      %v659 = vpop.f32.mrf.mxu0
      %v660 = vadd.f32 %v326, %v659
      %661 = vmatmul.bf16.gmra.mxu0 %v573
      %v662 = vpop.f32.mrf.mxu0
      %v663 = vadd.f32 %v326, %v662
      %v664 = vpop.f32.mrf.mxu0
      %v665 = vadd.f32 %v326, %v664
      %666 = vmatmul.bf16.gmra.mxu0 %v574
      %v667 = vpop.f32.mrf.mxu0
      %v668 = vadd.f32 %v326, %v667
      %v669 = vpop.f32.mrf.mxu0
      %v670 = vadd.f32 %v326, %v669
      %671 = vdwg.mxu0
      %vm672 = vcmask 31744
      %673 = vst.msk [vmem:[%s280] sm:$0xff] %vm672, %v633
      %674 = vst.msk [vmem:[%s280 + $0x8] sm:$0xff] %vm672, %v635
      %675 = vst.msk [vmem:[%s280 + $0x10] sm:$0xff] %vm672, %v638
      %676 = vst.msk [vmem:[%s280 + $0x18] sm:$0xff] %vm672, %v640
      %677 = vst.msk [vmem:[%s280 + $0x20] sm:$0xff] %vm672, %v643
      %678 = vst.msk [vmem:[%s280 + $0x28] sm:$0xff] %vm672, %v645
      %679 = vst.msk [vmem:[%s280 + $0x30] sm:$0xff] %vm672, %v648
      %680 = vst.msk [vmem:[%s280 + $0x38] sm:$0xff] %vm672, %v650
      %681 = vst.msk [vmem:[%s280 + $0x40] sm:$0xff] %vm672, %v653
      %682 = vst.msk [vmem:[%s280 + $0x48] sm:$0xff] %vm672, %v655
      %683 = vst.msk [vmem:[%s280 + $0x50] sm:$0xff] %vm672, %v658
      %684 = vst.msk [vmem:[%s280 + $0x58] sm:$0xff] %vm672, %v660
      %685 = vst.msk [vmem:[%s280 + $0x60] sm:$0xff] %vm672, %v663
      %686 = vst.msk [vmem:[%s280 + $0x68] sm:$0xff] %vm672, %v665
      %687 = vst.msk [vmem:[%s280 + $0x70] sm:$0xff] %vm672, %v668
      %688 = vst.msk [vmem:[%s280 + $0x78] sm:$0xff] %vm672, %v670
      %s689 = smul.u32 16, %s18
      %p690 = scmp.lt.s32.totalorder %s689, 31
      %s691 = scalar_select %p690, %s689, 31
      %s692 = smul.addr %s691, 8
      %s693 = scalar_lea.vmem %s7, %s692
      // Predicated region
      $region49: #{tpu_custom_call.1} parent=47 // pred_check
        %p694 = pneg %p188
      $region50: #{tpu_custom_call.1} parent=47 // pred_check_branch
        %696 = sbr.rel (%p694) target = $region52
      $region51: #{tpu_custom_call.1} parent=47 // pred_region
        %s697 = smul.u32 16, %s18
      $region52: #{tpu_custom_call.1} parent=47 // pred_fallthru
        _
    $region48: #{tpu_custom_call.1} parent=5 // pred_fallthru
      _
    %p698 = scmp.le.s32.totalorder 2, %s13
    // Predicated region
    $region53: #{tpu_custom_call.1} parent=5 // pred_check
      %p699 = pneg %p698
    $region54: #{tpu_custom_call.1} parent=5 // pred_check_branch
      %701 = sbr.rel (%p699) target = $region56
    $region55: #{tpu_custom_call.1} parent=5 // pred_region
      %s702 = ssub.s32 %s13, 2
      // Predicated region
      $region57: #{tpu_custom_call.1} parent=55 // pred_check
        %p703 = pneg %p194
      $region58: #{tpu_custom_call.1} parent=55 // pred_check_branch
        %705 = sbr.rel (%p703) target = $region60
      $region59: #{tpu_custom_call.1} parent=55 // pred_region
        %s706 = smul.u32 16, %s19
        %p707 = scmp.lt.s32.totalorder %s706, 31
        %s708 = scalar_select %p707, %s706, 31
        %s709 = smul.addr %s708, 8
        %s710 = scalar_lea.vmem %s7, %s709
      $region60: #{tpu_custom_call.1} parent=55 // pred_fallthru
        _
    $region56: #{tpu_custom_call.1} parent=5 // pred_fallthru
      _
  $region6: #{tpu_custom_call.1} parent=0 // loop_footer
    %s17 = sadd.s32 1, %s13
  $region7: #{tpu_custom_call.1} parent=0 // loop_footer_branch
    %12 = sbr.rel target = $region3
  $region8: #{tpu_custom_call.1} parent=0 // loop_exit
    _

</llo_original>
